<compile_context>
chip_gen: v6e
topology: v6e:2x2x1
jax: 0.10.0
libtpu: 0.0.40
codegen_flags: <defaults>
</compile_context>

<pallas_src>
import jax
import jax.numpy as jnp
from jax import lax
from jax.experimental import pallas as pl
from jax.experimental.pallas import tpu as pltpu

# ---- small shapes consistent with the module (input_dim=(C,H,W)) ----
N = 2                       # batch
C, H, W = 4, 16, 16         # input_dim
NUM_FILTERS = 8
KSIZE = 7
STRIDE_CONV = 1
PAD = (KSIZE - STRIDE_CONV) // 2        # = 3 -> "same" conv, matches the module's padding
POOL = 2
STRIDE_POOL = 2
HIDDEN = 32
NUM_CLASSES = 10
WEIGHT_SCALE = 1e-3
DROPOUT = 0.0

HO, WO = H, W                           # conv output spatial (stride 1, pad (K-1)/2)
HH, WH = HO // STRIDE_POOL, WO // STRIDE_POOL
PATCH = KSIZE * KSIZE * C               # im2col patch length = 196
PATCH_PAD = 256                         # zero-padded to 2x128 for clean K tiles
TM = HH * WH                            # pooled spatial positions per image = 64
QUADS = POOL * POOL                     # 4
QTM = QUADS * TM                        # conv output columns per image = 256
DFLAT = NUM_FILTERS * TM                # fc1 input features = 512
OUT_PAD = 128                           # class dim padded to one full lane tile


# ---------------- fused Pallas kernel (one grid step == one image) ----------------
def fused_cnn_kernel(p_ref, wcT_ref, bc_ref, w1p_ref, b1_ref, w2p_ref, b2p_ref, o_ref, a_sc):
    """conv (im2col matmul) + bias + relu + 2x2/2 maxpool + fc1 + (dropout p=0) + relu + fc2.

    p_ref  : (PATCH_PAD, QTM) bf16   this image's transposed patches, columns ordered (quadrant, pooled pos)
    wcT_ref: (F, PATCH_PAD)   bf16   conv weight, rows = filters, cols (kh, kw, c), zero-padded
    bc_ref : (F, 1)           f32    conv bias
    w1p_ref: (DFLAT, HIDDEN)  f32    fc1 weight transposed (rows in torch flatten order f*TM+t)
    b1_ref : (1, HIDDEN)      f32
    w2p_ref: (HIDDEN, OUT_PAD)f32    fc2 weight transposed, zero-padded to 128 classes
    b2p_ref: (1, OUT_PAD)     f32
    o_ref  : (1, 1, OUT_PAD)  f32    lane-dense output block for this image
    a_sc   : (1, DFLAT)       f32    VMEM scratch for the torch-flatten relayout
    """
    # Conv for this image & all 4 pool quadrants as ONE bf16 MXU matmul (f32 accumulate).
    z = jnp.dot(wcT_ref[...], p_ref[...], preferred_element_type=jnp.float32)   # (F, QTM)

    # 2x2/2 max pool: quadrants are contiguous TM-wide column blocks -> max of static slices.
    m = z[:, 0:TM]
    for q in range(1, QUADS):
        m = jnp.maximum(m, z[:, q * TM:(q + 1) * TM])

    # Bias hoisted past the max (constant over the pool window), ReLU once afterwards.
    pooled = jnp.maximum(m + bc_ref[...], 0.0)                                   # (F, TM) f32

    # Relayout (F, TM) -> (1, F*TM) in torch flatten order via 8 static lane stores (stays in VMEM).
    for f in range(NUM_FILTERS):
        a_sc[:, pl.ds(f * TM, TM)] = pooled[f:f + 1, :]
    a = a_sc[...]                                                                # (1, DFLAT)

    # fc1 (+bias) -> dropout p=0 (identity) -> relu -> fc2 (+bias), each a single matmul.
    h = jnp.maximum(jnp.dot(a, w1p_ref[...], preferred_element_type=jnp.float32) + b1_ref[...], 0.0)
    out = jnp.dot(h, w2p_ref[...], preferred_element_type=jnp.float32) + b2p_ref[...]   # (1, OUT_PAD)

    o_ref[...] = out[None]                                                       # full lane-dense store


# ---------------- one-time parameter re-layout (hoisted out of the forward) ----------------
def prepare_params(params):
    wc, bc, w1, b1, w2, b2 = params      # PyTorch-convention parameter shapes
    # conv weight (F, C, KH, KW) -> (F, KH*KW*C) matching patch row order, zero-pad K to 256, bf16.
    wcT = jnp.transpose(wc, (0, 2, 3, 1)).reshape(NUM_FILTERS, PATCH)
    wcT = jnp.pad(wcT, ((0, 0), (0, PATCH_PAD - PATCH))).astype(jnp.bfloat16)
    bcm = bc.reshape(NUM_FILTERS, 1).astype(jnp.float32)
    # fc1 weight (HIDDEN, DFLAT) -> (DFLAT, HIDDEN); rows already in torch flatten order f*TM + t.
    w1p = w1.T.astype(jnp.float32)
    b1m = b1.reshape(1, HIDDEN).astype(jnp.float32)
    # fc2 weight (CLASSES, HIDDEN) -> (HIDDEN, OUT_PAD) zero-padded so the output store is lane-dense.
    w2p = jnp.pad(w2.T, ((0, 0), (0, OUT_PAD - NUM_CLASSES))).astype(jnp.float32)
    b2p = jnp.pad(b2.reshape(1, NUM_CLASSES), ((0, 0), (0, OUT_PAD - NUM_CLASSES))).astype(jnp.float32)
    return (wcT, bcm, w1p, b1m, w2p, b2p)


# ---------------- forward ----------------
@jax.jit
def classification_cnn_forward(x_nchw, prepared):
    wcT, bcm, w1p, b1m, w2p, b2p = prepared
    n = x_nchw.shape[0]

    # im2col (pure data rearrangement, left to XLA; see TODO at top of file).
    x = jnp.transpose(x_nchw, (0, 2, 3, 1))                        # NHWC
    xp = jnp.pad(x, ((0, 0), (PAD, PAD), (PAD, PAD), (0, 0)))
    cols = []
    for kh in range(KSIZE):
        for kw in range(KSIZE):
            cols.append(xp[:, kh:kh + HO, kw:kw + WO, :])          # (n, HO, WO, C)
    pf = jnp.stack(cols, axis=3).reshape(n, HO, WO, PATCH)         # patch order (kh, kw, c)
    quads = []
    for a in range(POOL):
        for bq in range(POOL):
            q = pf[:, a::STRIDE_POOL, bq::STRIDE_POOL, :]          # (n, HH, WH, PATCH)
            quads.append(q.reshape(n, 1, TM, PATCH))
    rows = jnp.concatenate(quads, axis=1).reshape(n * QTM, PATCH)  # row order (image, quadrant, pos)
    rows = jnp.pad(rows, ((0, 0), (0, PATCH_PAD - PATCH)))         # K padded to 256 (zeros)
    patches_T = rows.T.astype(jnp.bfloat16)                        # (PATCH_PAD, n*QTM), bf16 MXU operand

    out = pl.pallas_call(
        fused_cnn_kernel,
        out_shape=jax.ShapeDtypeStruct((n, 1, OUT_PAD), jnp.float32),
        grid=(n,),
        in_specs=[
            pl.BlockSpec((PATCH_PAD, QTM), lambda i: (0, i)),            # this image's patches
            pl.BlockSpec((NUM_FILTERS, PATCH_PAD), lambda i: (0, 0)),    # weights stay VMEM-resident
            pl.BlockSpec((NUM_FILTERS, 1), lambda i: (0, 0)),
            pl.BlockSpec((DFLAT, HIDDEN), lambda i: (0, 0)),
            pl.BlockSpec((1, HIDDEN), lambda i: (0, 0)),
            pl.BlockSpec((HIDDEN, OUT_PAD), lambda i: (0, 0)),
            pl.BlockSpec((1, OUT_PAD), lambda i: (0, 0)),
        ],
        out_specs=pl.BlockSpec((1, 1, OUT_PAD), lambda i: (i, 0, 0)),
        scratch_shapes=[pltpu.VMEM((1, DFLAT), jnp.float32)],
        compiler_params=pltpu.CompilerParams(dimension_semantics=("parallel",)),
    )(patches_T, wcT, bcm, w1p, b1m, w2p, b2p)

    return out[:, 0, :NUM_CLASSES]


# ---------------- pure-JAX reference (for validation only) ----------------
def reference_forward(x_nchw, params):
    wc, bc, w1, b1, w2, b2 = params
    y = lax.conv_general_dilated(
        x_nchw, wc, window_strides=(STRIDE_CONV, STRIDE_CONV),
        padding=[(PAD, PAD), (PAD, PAD)],
        dimension_numbers=("NCHW", "OIHW", "NCHW"))
    y = jnp.maximum(y + bc[None, :, None, None], 0.0)
    y = lax.reduce_window(y, -jnp.inf, lax.max,
                          (1, 1, POOL, POOL), (1, 1, STRIDE_POOL, STRIDE_POOL), "VALID")
    flat = y.reshape(x_nchw.shape[0], -1)
    h = jnp.maximum(flat @ w1.T + b1, 0.0)
    return h @ w2.T + b2


def init_params(key):
    ks = jax.random.split(key, 6)
    wc = WEIGHT_SCALE * jax.random.normal(ks[0], (NUM_FILTERS, C, KSIZE, KSIZE), jnp.float32)
    bc = 0.1 * jax.random.normal(ks[1], (NUM_FILTERS,), jnp.float32)
    bound1 = 1.0 / (DFLAT ** 0.5)
    w1 = jax.random.uniform(ks[2], (HIDDEN, DFLAT), jnp.float32, -bound1, bound1)
    b1 = jax.random.uniform(ks[3], (HIDDEN,), jnp.float32, -bound1, bound1)
    bound2 = 1.0 / (HIDDEN ** 0.5)
    w2 = jax.random.uniform(ks[4], (NUM_CLASSES, HIDDEN), jnp.float32, -bound2, bound2)
    b2 = jax.random.uniform(ks[5], (NUM_CLASSES,), jnp.float32, -bound2, bound2)
    return (wc, bc, w1, b1, w2, b2)


if __name__ == "__main__":
    key = jax.random.PRNGKey(0)
    kx, kp = jax.random.split(key)
    x = jax.random.normal(kx, (N, C, H, W), jnp.float32)
    params = init_params(kp)
    prepared = prepare_params(params)      # one-time weight re-layout, outside the forward

    out = classification_cnn_forward(x, prepared)
    out = jax.block_until_ready(out)

    assert out.shape == (N, NUM_CLASSES), out.shape
    ref = reference_forward(x, params)
    # bf16 conv operands with f32 accumulation: slightly looser atol than pure-f32.
    if not bool(jnp.allclose(out, ref, rtol=5e-2, atol=1e-3)):
        raise AssertionError(
            f"mismatch vs reference, max abs diff = {float(jnp.max(jnp.abs(out - ref)))}")
    print("KERNEL_OK")
</pallas_src>

<mosaic_0001>
module attributes {stable_mosaic.version = 11 : i64} {
  func.func @fused_cnn_kernel(%arg0: i32, %arg1: memref<256x256xbf16, #tpu.memory_space<vmem>>, %arg2: memref<8x256xbf16, #tpu.memory_space<vmem>>, %arg3: memref<8x1xf32, #tpu.memory_space<vmem>>, %arg4: memref<512x32xf32, #tpu.memory_space<vmem>>, %arg5: memref<1x32xf32, #tpu.memory_space<vmem>>, %arg6: memref<32x128xf32, #tpu.memory_space<vmem>>, %arg7: memref<1x128xf32, #tpu.memory_space<vmem>>, %arg8: memref<1x1x128xf32, #tpu.memory_space<vmem>>, %arg9: memref<1x512xf32, #tpu.memory_space<vmem>>) attributes {dimension_semantics = [#tpu.dimension_semantics<parallel>], iteration_bounds = array<i64: 2>, scalar_prefetch = 0 : i64, scratch_operands = 1 : i64, tpu.core_type = #tpu.core_type<tc>, window_params = [{transform_indices = @transform_0, window_bounds = array<i64: 256, 256>}, {pipeline_mode = #tpu.pipeline_mode<synchronous>, transform_indices = @transform_1, window_bounds = array<i64: 8, 256>}, {pipeline_mode = #tpu.pipeline_mode<synchronous>, transform_indices = @transform_2, window_bounds = array<i64: 8, 1>}, {pipeline_mode = #tpu.pipeline_mode<synchronous>, transform_indices = @transform_3, window_bounds = array<i64: 512, 32>}, {pipeline_mode = #tpu.pipeline_mode<synchronous>, transform_indices = @transform_4, window_bounds = array<i64: 1, 32>}, {pipeline_mode = #tpu.pipeline_mode<synchronous>, transform_indices = @transform_5, window_bounds = array<i64: 32, 128>}, {pipeline_mode = #tpu.pipeline_mode<synchronous>, transform_indices = @transform_6, window_bounds = array<i64: 1, 128>}, {transform_indices = @transform_7, window_bounds = array<i64: 1, 1, 128>}]} {
    %c0 = arith.constant 0 : index
    %c0_0 = arith.constant 0 : index
    %0 = vector.load %arg2[%c0, %c0_0] : memref<8x256xbf16, #tpu.memory_space<vmem>>, vector<8x256xbf16>
    %c0_1 = arith.constant 0 : index
    %c0_2 = arith.constant 0 : index
    %1 = vector.load %arg1[%c0_1, %c0_2] : memref<256x256xbf16, #tpu.memory_space<vmem>>, vector<256x256xbf16>
    %cst = arith.constant dense<0.000000e+00> : vector<8x256xf32>
    %2 = tpu.matmul %0, %1, %cst {dimension_numbers = #tpu.dot_dimension_numbers<[1], [0], [0], [1], [0, 0, 1, 1], [], []>} : vector<8x256xbf16>, vector<256x256xbf16>, vector<8x256xf32> -> vector<8x256xf32>
    %3 = vector.extract_strided_slice %2 {offsets = [0, 0], sizes = [8, 64], strides = [1, 1]} : vector<8x256xf32> to vector<8x64xf32>
    %4 = vector.extract_strided_slice %2 {offsets = [0, 64], sizes = [8, 64], strides = [1, 1]} : vector<8x256xf32> to vector<8x64xf32>
    %5 = arith.maximumf %3, %4 : vector<8x64xf32>
    %6 = vector.extract_strided_slice %2 {offsets = [0, 128], sizes = [8, 64], strides = [1, 1]} : vector<8x256xf32> to vector<8x64xf32>
    %7 = arith.maximumf %5, %6 : vector<8x64xf32>
    %8 = vector.extract_strided_slice %2 {offsets = [0, 192], sizes = [8, 64], strides = [1, 1]} : vector<8x256xf32> to vector<8x64xf32>
    %9 = arith.maximumf %7, %8 : vector<8x64xf32>
    %c0_3 = arith.constant 0 : index
    %c0_4 = arith.constant 0 : index
    %10 = vector.load %arg3[%c0_3, %c0_4] : memref<8x1xf32, #tpu.memory_space<vmem>>, vector<8x1xf32>
    %11 = vector.broadcast %10 : vector<8x1xf32> to vector<8x64xf32>
    %12 = arith.addf %9, %11 : vector<8x64xf32>
    %cst_5 = arith.constant 0.000000e+00 : f32
    %13 = vector.broadcast %cst_5 : f32 to vector<8x64xf32>
    %14 = arith.maximumf %12, %13 : vector<8x64xf32>
    %15 = vector.extract_strided_slice %14 {offsets = [0, 0], sizes = [1, 64], strides = [1, 1]} : vector<8x64xf32> to vector<1x64xf32>
    %c0_6 = arith.constant 0 : index
    %c0_7 = arith.constant 0 : index
    %16 = vector.load %arg9[%c0_6, %c0_7] : memref<1x512xf32, #tpu.memory_space<vmem>>, vector<1x64xf32>
    tpu.vector_store %arg9[%c0_6, %c0_7], %15 {strides = array<i32>} : memref<1x512xf32, #tpu.memory_space<vmem>>, vector<1x64xf32>,
    %17 = vector.extract_strided_slice %14 {offsets = [1, 0], sizes = [1, 64], strides = [1, 1]} : vector<8x64xf32> to vector<1x64xf32>
    %c0_8 = arith.constant 0 : index
    %c64 = arith.constant 64 : index
    %18 = vector.load %arg9[%c0_8, %c64] : memref<1x512xf32, #tpu.memory_space<vmem>>, vector<1x64xf32>
    tpu.vector_store %arg9[%c0_8, %c64], %17 {strides = array<i32>} : memref<1x512xf32, #tpu.memory_space<vmem>>, vector<1x64xf32>,
    %19 = vector.extract_strided_slice %14 {offsets = [2, 0], sizes = [1, 64], strides = [1, 1]} : vector<8x64xf32> to vector<1x64xf32>
    %c0_9 = arith.constant 0 : index
    %c128 = arith.constant 128 : index
    %20 = vector.load %arg9[%c0_9, %c128] : memref<1x512xf32, #tpu.memory_space<vmem>>, vector<1x64xf32>
    tpu.vector_store %arg9[%c0_9, %c128], %19 {strides = array<i32>} : memref<1x512xf32, #tpu.memory_space<vmem>>, vector<1x64xf32>,
    %21 = vector.extract_strided_slice %14 {offsets = [3, 0], sizes = [1, 64], strides = [1, 1]} : vector<8x64xf32> to vector<1x64xf32>
    %c0_10 = arith.constant 0 : index
    %c192 = arith.constant 192 : index
    %22 = vector.load %arg9[%c0_10, %c192] : memref<1x512xf32, #tpu.memory_space<vmem>>, vector<1x64xf32>
    tpu.vector_store %arg9[%c0_10, %c192], %21 {strides = array<i32>} : memref<1x512xf32, #tpu.memory_space<vmem>>, vector<1x64xf32>,
    %23 = vector.extract_strided_slice %14 {offsets = [4, 0], sizes = [1, 64], strides = [1, 1]} : vector<8x64xf32> to vector<1x64xf32>
    %c0_11 = arith.constant 0 : index
    %c256 = arith.constant 256 : index
    %24 = vector.load %arg9[%c0_11, %c256] : memref<1x512xf32, #tpu.memory_space<vmem>>, vector<1x64xf32>
    tpu.vector_store %arg9[%c0_11, %c256], %23 {strides = array<i32>} : memref<1x512xf32, #tpu.memory_space<vmem>>, vector<1x64xf32>,
    %25 = vector.extract_strided_slice %14 {offsets = [5, 0], sizes = [1, 64], strides = [1, 1]} : vector<8x64xf32> to vector<1x64xf32>
    %c0_12 = arith.constant 0 : index
    %c320 = arith.constant 320 : index
    %26 = vector.load %arg9[%c0_12, %c320] : memref<1x512xf32, #tpu.memory_space<vmem>>, vector<1x64xf32>
    tpu.vector_store %arg9[%c0_12, %c320], %25 {strides = array<i32>} : memref<1x512xf32, #tpu.memory_space<vmem>>, vector<1x64xf32>,
    %27 = vector.extract_strided_slice %14 {offsets = [6, 0], sizes = [1, 64], strides = [1, 1]} : vector<8x64xf32> to vector<1x64xf32>
    %c0_13 = arith.constant 0 : index
    %c384 = arith.constant 384 : index
    %28 = vector.load %arg9[%c0_13, %c384] : memref<1x512xf32, #tpu.memory_space<vmem>>, vector<1x64xf32>
    tpu.vector_store %arg9[%c0_13, %c384], %27 {strides = array<i32>} : memref<1x512xf32, #tpu.memory_space<vmem>>, vector<1x64xf32>,
    %29 = vector.extract_strided_slice %14 {offsets = [7, 0], sizes = [1, 64], strides = [1, 1]} : vector<8x64xf32> to vector<1x64xf32>
    %c0_14 = arith.constant 0 : index
    %c448 = arith.constant 448 : index
    %30 = vector.load %arg9[%c0_14, %c448] : memref<1x512xf32, #tpu.memory_space<vmem>>, vector<1x64xf32>
    tpu.vector_store %arg9[%c0_14, %c448], %29 {strides = array<i32>} : memref<1x512xf32, #tpu.memory_space<vmem>>, vector<1x64xf32>,
    %c0_15 = arith.constant 0 : index
    %c0_16 = arith.constant 0 : index
    %31 = vector.load %arg9[%c0_15, %c0_16] : memref<1x512xf32, #tpu.memory_space<vmem>>, vector<1x512xf32>
    %c0_17 = arith.constant 0 : index
    %c0_18 = arith.constant 0 : index
    %32 = vector.load %arg4[%c0_17, %c0_18] : memref<512x32xf32, #tpu.memory_space<vmem>>, vector<512x32xf32>
    %cst_19 = arith.constant dense<0.000000e+00> : vector<1x32xf32>
    %33 = tpu.matmul %31, %32, %cst_19 {dimension_numbers = #tpu.dot_dimension_numbers<[1], [0], [0], [1], [0, 0, 1, 1], [], []>} : vector<1x512xf32>, vector<512x32xf32>, vector<1x32xf32> -> vector<1x32xf32>
    %c0_20 = arith.constant 0 : index
    %c0_21 = arith.constant 0 : index
    %34 = vector.load %arg5[%c0_20, %c0_21] : memref<1x32xf32, #tpu.memory_space<vmem>>, vector<1x32xf32>
    %35 = arith.addf %33, %34 : vector<1x32xf32>
    %cst_22 = arith.constant 0.000000e+00 : f32
    %36 = vector.broadcast %cst_22 : f32 to vector<1x32xf32>
    %37 = arith.maximumf %35, %36 : vector<1x32xf32>
    %c0_23 = arith.constant 0 : index
    %c0_24 = arith.constant 0 : index
    %38 = vector.load %arg6[%c0_23, %c0_24] : memref<32x128xf32, #tpu.memory_space<vmem>>, vector<32x128xf32>
    %cst_25 = arith.constant dense<0.000000e+00> : vector<1x128xf32>
    %39 = tpu.matmul %37, %38, %cst_25 {dimension_numbers = #tpu.dot_dimension_numbers<[1], [0], [0], [1], [0, 0, 1, 1], [], []>} : vector<1x32xf32>, vector<32x128xf32>, vector<1x128xf32> -> vector<1x128xf32>
    %c0_26 = arith.constant 0 : index
    %c0_27 = arith.constant 0 : index
    %40 = vector.load %arg7[%c0_26, %c0_27] : memref<1x128xf32, #tpu.memory_space<vmem>>, vector<1x128xf32>
    %41 = arith.addf %39, %40 : vector<1x128xf32>
    %42 = vector.shape_cast %41 : vector<1x128xf32> to vector<1x1x128xf32>
    %c0_28 = arith.constant 0 : index
    %c0_29 = arith.constant 0 : index
    %c0_30 = arith.constant 0 : index
    %43 = vector.load %arg8[%c0_28, %c0_29, %c0_30] : memref<1x1x128xf32, #tpu.memory_space<vmem>>, vector<1x1x128xf32>
    tpu.vector_store %arg8[%c0_28, %c0_29, %c0_30], %42 {strides = array<i32>} : memref<1x1x128xf32, #tpu.memory_space<vmem>>, vector<1x1x128xf32>,
    return
  }
  func.func @transform_0(%arg0: i32) -> (i32, i32) {
    %c0_i32 = arith.constant 0 : i32
    %c0_i32_0 = arith.constant 0 : i32
    return %c0_i32, %arg0 : i32, i32
  }
  func.func @transform_1(%arg0: i32) -> (i32, i32) {
    %c0_i32 = arith.constant 0 : i32
    %c0_i32_0 = arith.constant 0 : i32
    %c0_i32_1 = arith.constant 0 : i32
    return %c0_i32, %c0_i32_0 : i32, i32
  }
  func.func @transform_2(%arg0: i32) -> (i32, i32) {
    %c0_i32 = arith.constant 0 : i32
    %c0_i32_0 = arith.constant 0 : i32
    %c0_i32_1 = arith.constant 0 : i32
    return %c0_i32, %c0_i32_0 : i32, i32
  }
  func.func @transform_3(%arg0: i32) -> (i32, i32) {
    %c0_i32 = arith.constant 0 : i32
    %c0_i32_0 = arith.constant 0 : i32
    %c0_i32_1 = arith.constant 0 : i32
    return %c0_i32, %c0_i32_0 : i32, i32
  }
  func.func @transform_4(%arg0: i32) -> (i32, i32) {
    %c0_i32 = arith.constant 0 : i32
    %c0_i32_0 = arith.constant 0 : i32
    %c0_i32_1 = arith.constant 0 : i32
    return %c0_i32, %c0_i32_0 : i32, i32
  }
  func.func @transform_5(%arg0: i32) -> (i32, i32) {
    %c0_i32 = arith.constant 0 : i32
    %c0_i32_0 = arith.constant 0 : i32
    %c0_i32_1 = arith.constant 0 : i32
    return %c0_i32, %c0_i32_0 : i32, i32
  }
  func.func @transform_6(%arg0: i32) -> (i32, i32) {
    %c0_i32 = arith.constant 0 : i32
    %c0_i32_0 = arith.constant 0 : i32
    %c0_i32_1 = arith.constant 0 : i32
    return %c0_i32, %c0_i32_0 : i32, i32
  }
  func.func @transform_7(%arg0: i32) -> (i32, i32, i32) {
    %c0_i32 = arith.constant 0 : i32
    %c0_i32_0 = arith.constant 0 : i32
    %c0_i32_1 = arith.constant 0 : i32
    return %arg0, %c0_i32, %c0_i32_0 : i32, i32, i32
  }
}

</mosaic_0001>

<llo_original>
// kernel: classification_cnn_forward.1
$region0: #{classification_cnn_forward.1}
  #allocation0 [shape = 'u32[]', space=smem, size = 0x4, offset = 0x4, fixed_abs, tag = 'smem constant byte address 0x4 - core index']
  #allocation1 [shape = 'u32[144,128]{1,0:T(1,128)}', space=vmem, size = 0x12000, scoped, tag = 'internal scratch']
  #allocation2 [shape = 'f32[1,512]{1,0:T(1,128)}', space=vmem, size = 0x800, scoped, tag = 'scratch operand']
  %s0 = inlined_call_operand.vmem [shape: bf16[256,512], index: 0, kind: input, shape index: {}]
  %s1 = inlined_call_operand.vmem [shape: bf16[8,256], index: 1, kind: input, shape index: {}]
  %s2 = inlined_call_operand.vmem [shape: f32[8,1], index: 2, kind: input, shape index: {}]
  %s3 = inlined_call_operand.vmem [shape: f32[512,32], index: 3, kind: input, shape index: {}]
  %s4 = inlined_call_operand.vmem [shape: f32[1,32], index: 4, kind: input, shape index: {}]
  %s5 = inlined_call_operand.vmem [shape: f32[32,128], index: 5, kind: input, shape index: {}]
  %s6 = inlined_call_operand.vmem [shape: f32[1,128], index: 6, kind: input, shape index: {}]
  %s7 = inlined_call_operand.hbm [shape: f32[2,1,128], index: 7, kind: output, shape index: {}]
  %s8 = sld [smem:[#allocation0]]
  $region99: #{classification_cnn_forward.1} parent=0
    _
  %s10 = ssub.s32 1, %s8
  %s11 = scalar_select 0, %s10, %s8
  $region1: #{classification_cnn_forward.1} parent=0
    #allocation3 [shape = 'u8[262144]{0}', space=vmem, size = 0x40000, scoped, tag = 'input window, operand 0']
    #allocation4 [shape = 'u8[1024]{0}', space=vmem, size = 0x400, scoped, tag = 'output window, operand 0']
    #allocation5 [shape = 's32[2]{0}', space=sflag, size = 0x8, scoped, tag = 'scoped memory for classification_cnn_forward.1']
    %12 = vsyncpa [#allocation5], 0
    %s13 = scalar_lea.sflag [#allocation5], 1
    %14 = vsyncpa %s13, 0
    loop: start=0, step=1, limit=4
    $region2: #{classification_cnn_forward.1} parent=1 // loop_pre_header
      _
    $region3: #{classification_cnn_forward.1} parent=1 // loop_header
      %s16 = sphi 0, %s20
      %p17 = scmp.ge.s32.totalorder %s16, 4
      %s26 = sphi 0, %s28
      %s29 = sphi 0, %s26
      %s30 = sphi 0, %s29
      %s46 = sphi 0, %s30
      %s50 = sphi 0, %s50
      %s52 = sphi 0, %s50
      %s53 = sphi 0, %s52
      %s67 = sphi 0, %s53
      %s71 = sphi 0, %s71
      %s73 = sphi 0, %s71
      %s74 = sphi 0, %s73
      %s88 = sphi 0, %s74
      %s92 = sphi 0, %s92
      %s94 = sphi 0, %s92
      %s95 = sphi 0, %s94
      %s109 = sphi 0, %s95
      %s113 = sphi 0, %s113
      %s115 = sphi 0, %s113
      %s116 = sphi 0, %s115
      %s130 = sphi 0, %s116
      %s134 = sphi 0, %s134
      %s136 = sphi 0, %s134
      %s137 = sphi 0, %s136
      %s151 = sphi 0, %s137
      %s155 = sphi 0, %s155
      %s157 = sphi 0, %s155
      %s158 = sphi 0, %s157
      %s172 = sphi 0, %s158
      %s178 = sphi 0, %s180
      %s181 = sphi 0, %s178
      %s182 = sphi 0, %s181
      %s198 = sphi 0, %s182
    $region4: #{classification_cnn_forward.1} parent=1 // loop_header_branch
      %19 = sbr.rel (%p17) target = $region8
    $region5: #{classification_cnn_forward.1} parent=1 // loop_body
      %s21 = ssub.s32 %s16, 1
      %s22 = ssub.s32 %s16, 2
      %s23 = sadd.s32 %s16, 1
      %s24 = ssub.s32 %s16, %s23
      %p25 = scmp.eq.s32.totalorder %s24, 0
      %s27 = sadd.s32 %s26, 1
      %s28 = scalar_select %p25, %s26, %s27
      %p31 = pneg %p25
      %p32 = scmp.eq.s32.totalorder %s16, 1
      %p33 = por %p31, %p32
      %p34 = scmp.ne.s32.totalorder %s26, %s29
      %p35 = scmp.eq.s32.totalorder %s16, 0
      %p36 = por %p34, %p35
      %p37 = scmp.ne.s32.totalorder %s26, %s29
      %p38 = scmp.eq.s32.totalorder %s21, 1
      %p39 = por %p37, %p38
      %p40 = scmp.ne.s32.totalorder %s29, %s30
      %p41 = scmp.eq.s32.totalorder %s21, 0
      %p42 = por %p40, %p41
      %p43 = scmp.ne.s32.totalorder %s29, %s30
      %p44 = scmp.eq.s32.totalorder %s22, 1
      %p45 = por %p43, %p44
      %p47 = scmp.ne.s32.totalorder %s30, %s46
      %p48 = scmp.eq.s32.totalorder %s22, 0
      %p49 = por %p47, %p48
      %s51 = sadd.s32 %s50, 1
      %p54 = scmp.eq.s32.totalorder %s16, 1
      %p55 = scmp.ne.s32.totalorder %s50, %s52
      %p56 = scmp.eq.s32.totalorder %s16, 0
      %p57 = por %p55, %p56
      %p58 = scmp.ne.s32.totalorder %s50, %s52
      %p59 = scmp.eq.s32.totalorder %s21, 1
      %p60 = por %p58, %p59
      %p61 = scmp.ne.s32.totalorder %s52, %s53
      %p62 = scmp.eq.s32.totalorder %s21, 0
      %p63 = por %p61, %p62
      %p64 = scmp.ne.s32.totalorder %s52, %s53
      %p65 = scmp.eq.s32.totalorder %s22, 1
      %p66 = por %p64, %p65
      %p68 = scmp.ne.s32.totalorder %s53, %s67
      %p69 = scmp.eq.s32.totalorder %s22, 0
      %p70 = por %p68, %p69
      %s72 = sadd.s32 %s71, 1
      %p75 = scmp.eq.s32.totalorder %s16, 1
      %p76 = scmp.ne.s32.totalorder %s71, %s73
      %p77 = scmp.eq.s32.totalorder %s16, 0
      %p78 = por %p76, %p77
      %p79 = scmp.ne.s32.totalorder %s71, %s73
      %p80 = scmp.eq.s32.totalorder %s21, 1
      %p81 = por %p79, %p80
      %p82 = scmp.ne.s32.totalorder %s73, %s74
      %p83 = scmp.eq.s32.totalorder %s21, 0
      %p84 = por %p82, %p83
      %p85 = scmp.ne.s32.totalorder %s73, %s74
      %p86 = scmp.eq.s32.totalorder %s22, 1
      %p87 = por %p85, %p86
      %p89 = scmp.ne.s32.totalorder %s74, %s88
      %p90 = scmp.eq.s32.totalorder %s22, 0
      %p91 = por %p89, %p90
      %s93 = sadd.s32 %s92, 1
      %p96 = scmp.eq.s32.totalorder %s16, 1
      %p97 = scmp.ne.s32.totalorder %s92, %s94
      %p98 = scmp.eq.s32.totalorder %s16, 0
      %p99 = por %p97, %p98
      %p100 = scmp.ne.s32.totalorder %s92, %s94
      %p101 = scmp.eq.s32.totalorder %s21, 1
      %p102 = por %p100, %p101
      %p103 = scmp.ne.s32.totalorder %s94, %s95
      %p104 = scmp.eq.s32.totalorder %s21, 0
      %p105 = por %p103, %p104
      %p106 = scmp.ne.s32.totalorder %s94, %s95
      %p107 = scmp.eq.s32.totalorder %s22, 1
      %p108 = por %p106, %p107
      %p110 = scmp.ne.s32.totalorder %s95, %s109
      %p111 = scmp.eq.s32.totalorder %s22, 0
      %p112 = por %p110, %p111
      %s114 = sadd.s32 %s113, 1
      %p117 = scmp.eq.s32.totalorder %s16, 1
      %p118 = scmp.ne.s32.totalorder %s113, %s115
      %p119 = scmp.eq.s32.totalorder %s16, 0
      %p120 = por %p118, %p119
      %p121 = scmp.ne.s32.totalorder %s113, %s115
      %p122 = scmp.eq.s32.totalorder %s21, 1
      %p123 = por %p121, %p122
      %p124 = scmp.ne.s32.totalorder %s115, %s116
      %p125 = scmp.eq.s32.totalorder %s21, 0
      %p126 = por %p124, %p125
      %p127 = scmp.ne.s32.totalorder %s115, %s116
      %p128 = scmp.eq.s32.totalorder %s22, 1
      %p129 = por %p127, %p128
      %p131 = scmp.ne.s32.totalorder %s116, %s130
      %p132 = scmp.eq.s32.totalorder %s22, 0
      %p133 = por %p131, %p132
      %s135 = sadd.s32 %s134, 1
      %p138 = scmp.eq.s32.totalorder %s16, 1
      %p139 = scmp.ne.s32.totalorder %s134, %s136
      %p140 = scmp.eq.s32.totalorder %s16, 0
      %p141 = por %p139, %p140
      %p142 = scmp.ne.s32.totalorder %s134, %s136
      %p143 = scmp.eq.s32.totalorder %s21, 1
      %p144 = por %p142, %p143
      %p145 = scmp.ne.s32.totalorder %s136, %s137
      %p146 = scmp.eq.s32.totalorder %s21, 0
      %p147 = por %p145, %p146
      %p148 = scmp.ne.s32.totalorder %s136, %s137
      %p149 = scmp.eq.s32.totalorder %s22, 1
      %p150 = por %p148, %p149
      %p152 = scmp.ne.s32.totalorder %s137, %s151
      %p153 = scmp.eq.s32.totalorder %s22, 0
      %p154 = por %p152, %p153
      %s156 = sadd.s32 %s155, 1
      %p159 = scmp.eq.s32.totalorder %s16, 1
      %p160 = scmp.ne.s32.totalorder %s155, %s157
      %p161 = scmp.eq.s32.totalorder %s16, 0
      %p162 = por %p160, %p161
      %p163 = scmp.ne.s32.totalorder %s155, %s157
      %p164 = scmp.eq.s32.totalorder %s21, 1
      %p165 = por %p163, %p164
      %p166 = scmp.ne.s32.totalorder %s157, %s158
      %p167 = scmp.eq.s32.totalorder %s21, 0
      %p168 = por %p166, %p167
      %p169 = scmp.ne.s32.totalorder %s157, %s158
      %p170 = scmp.eq.s32.totalorder %s22, 1
      %p171 = por %p169, %p170
      %p173 = scmp.ne.s32.totalorder %s158, %s172
      %p174 = scmp.eq.s32.totalorder %s22, 0
      %p175 = por %p173, %p174
      %s176 = ssub.s32 %s16, %s23
      %p177 = scmp.eq.s32.totalorder %s176, 0
      %s179 = sadd.s32 %s178, 1
      %s180 = scalar_select %p177, %s178, %s179
      %p183 = pneg %p177
      %p184 = scmp.eq.s32.totalorder %s16, 1
      %p185 = por %p183, %p184
      %p186 = scmp.ne.s32.totalorder %s178, %s181
      %p187 = scmp.eq.s32.totalorder %s16, 0
      %p188 = por %p186, %p187
      %p189 = scmp.ne.s32.totalorder %s178, %s181
      %p190 = scmp.eq.s32.totalorder %s21, 1
      %p191 = por %p189, %p190
      %p192 = scmp.ne.s32.totalorder %s181, %s182
      %p193 = scmp.eq.s32.totalorder %s21, 0
      %p194 = por %p192, %p193
      %p195 = scmp.ne.s32.totalorder %s181, %s182
      %p196 = scmp.eq.s32.totalorder %s22, 1
      %p197 = por %p195, %p196
      %p199 = scmp.ne.s32.totalorder %s182, %s198
      %p200 = scmp.eq.s32.totalorder %s22, 0
      %p201 = por %p199, %p200
      %p202 = scmp.le.s32.totalorder 1, %s16
      %p203 = scmp.lt.s32.totalorder %s16, 3
      %p204 = pnand %p202, %p203
      %p205 = pneg %p204
      // Predicated region
      $region9: #{classification_cnn_forward.1} parent=5 // pred_check
        _
      $region10: #{classification_cnn_forward.1} parent=5 // pred_check_branch
        %207 = sbr.rel (%p204) target = $region12
      $region11: #{classification_cnn_forward.1} parent=5 // pred_region
        %s208 = ssub.s32 %s16, 1
        // Predicated region
        $region13: #{classification_cnn_forward.1} parent=11 // pred_check
          %p209 = pneg %p63
        $region14: #{classification_cnn_forward.1} parent=11 // pred_check_branch
          %211 = sbr.rel (%p209) target = $region16
        $region15: #{classification_cnn_forward.1} parent=11 // pred_region
          _
        $region16: #{classification_cnn_forward.1} parent=11 // pred_fallthru
          _
        // Predicated region
        $region17: #{classification_cnn_forward.1} parent=11 // pred_check
          %p212 = pneg %p84
        $region18: #{classification_cnn_forward.1} parent=11 // pred_check_branch
          %214 = sbr.rel (%p212) target = $region20
        $region19: #{classification_cnn_forward.1} parent=11 // pred_region
          _
        $region20: #{classification_cnn_forward.1} parent=11 // pred_fallthru
          _
        // Predicated region
        $region21: #{classification_cnn_forward.1} parent=11 // pred_check
          %p215 = pneg %p105
        $region22: #{classification_cnn_forward.1} parent=11 // pred_check_branch
          %217 = sbr.rel (%p215) target = $region24
        $region23: #{classification_cnn_forward.1} parent=11 // pred_region
          _
        $region24: #{classification_cnn_forward.1} parent=11 // pred_fallthru
          _
        // Predicated region
        $region25: #{classification_cnn_forward.1} parent=11 // pred_check
          %p218 = pneg %p126
        $region26: #{classification_cnn_forward.1} parent=11 // pred_check_branch
          %220 = sbr.rel (%p218) target = $region28
        $region27: #{classification_cnn_forward.1} parent=11 // pred_region
          _
        $region28: #{classification_cnn_forward.1} parent=11 // pred_fallthru
          _
        // Predicated region
        $region29: #{classification_cnn_forward.1} parent=11 // pred_check
          %p221 = pneg %p147
        $region30: #{classification_cnn_forward.1} parent=11 // pred_check_branch
          %223 = sbr.rel (%p221) target = $region32
        $region31: #{classification_cnn_forward.1} parent=11 // pred_region
          _
        $region32: #{classification_cnn_forward.1} parent=11 // pred_fallthru
          _
        // Predicated region
        $region33: #{classification_cnn_forward.1} parent=11 // pred_check
          %p224 = pneg %p168
        $region34: #{classification_cnn_forward.1} parent=11 // pred_check_branch
          %226 = sbr.rel (%p224) target = $region36
        $region35: #{classification_cnn_forward.1} parent=11 // pred_region
          _
        $region36: #{classification_cnn_forward.1} parent=11 // pred_fallthru
          _
      $region12: #{classification_cnn_forward.1} parent=5 // pred_fallthru
        _
      %p227 = scmp.lt.s32.totalorder %s16, 2
      // Predicated region
      $region37: #{classification_cnn_forward.1} parent=5 // pred_check
        %p228 = pneg %p227
      $region38: #{classification_cnn_forward.1} parent=5 // pred_check_branch
        %230 = sbr.rel (%p228) target = $region40
      $region39: #{classification_cnn_forward.1} parent=5 // pred_region
        // Predicated region
        $region41: #{classification_cnn_forward.1} parent=39 // pred_check
          %p231 = pneg %p36
        $region42: #{classification_cnn_forward.1} parent=39 // pred_check_branch
          %233 = sbr.rel (%p231) target = $region44
        $region43: #{classification_cnn_forward.1} parent=39 // pred_region
          %s234 = sand.u32 %s26, 1
          %s235 = sand.u32 %s26, 1
          %s236 = smul.addr %s235, 256
          %s237 = scalar_lea.vmem [#allocation3], %s236
          %s238 = smul.u32 2, %s16
          %s239 = smul.addr %s238, 4
          %s240 = scalar_lea.vmem %s0, %s239
          // Predicated region
          $region45: #{classification_cnn_forward.1} parent=43 // pred_check
            _
          $region46: #{classification_cnn_forward.1} parent=43 // pred_check_branch
            %242 = sbr.rel (0) target = $region48
          $region47: #{classification_cnn_forward.1} parent=43 // pred_region
            // Predicated region
            $region49: #{classification_cnn_forward.1} parent=47 // pred_check
              _
            $region50: #{classification_cnn_forward.1} parent=47 // pred_check_branch
              %244 = sbr.rel (0) target = $region52
            $region51: #{classification_cnn_forward.1} parent=47 // pred_region
              // Predicated region
              $region64: #{classification_cnn_forward.1} parent=51 // pred_check
                _
              $region65: #{classification_cnn_forward.1} parent=51 // pred_check_branch
                %322 = sbr.rel (0) target = $region67
              $region66: #{classification_cnn_forward.1} parent=51 // pred_region
                loop: start=0, step=1, limit=1
                $region68: #{classification_cnn_forward.1} parent=66 // loop_pre_header
                  _
                $region69: #{classification_cnn_forward.1} parent=66 // loop_header
                  %s324 = sphi 0, %s328
                  %p325 = scmp.ge.s32.totalorder %s324, 1
                  %s329 = sphi %s240, %s240
                  %s330 = sphi %s237, %s237
                $region70: #{classification_cnn_forward.1} parent=66 // loop_header_branch
                  %327 = sbr.rel (%p325) target = $region74
                $region71: #{classification_cnn_forward.1} parent=66 // loop_body
                  %v331 = vld [vmem:[%s329] sm:$0xff]
                  %332 = vst [vmem:[%s330] sm:$0xff] %v331
                  %v333 = vld [vmem:[%s329 + $0x10] sm:$0xff]
                  %334 = vst [vmem:[%s330 + $0x8] sm:$0xff] %v333
                  %v335 = vld [vmem:[%s329 + $0x20] sm:$0xff]
                  %336 = vst [vmem:[%s330 + $0x10] sm:$0xff] %v335
                  %v337 = vld [vmem:[%s329 + $0x30] sm:$0xff]
                  %338 = vst [vmem:[%s330 + $0x18] sm:$0xff] %v337
                  %v339 = vld [vmem:[%s329 + $0x40] sm:$0xff]
                  %340 = vst [vmem:[%s330 + $0x20] sm:$0xff] %v339
                  %v341 = vld [vmem:[%s329 + $0x50] sm:$0xff]
                  %342 = vst [vmem:[%s330 + $0x28] sm:$0xff] %v341
                  %v343 = vld [vmem:[%s329 + $0x60] sm:$0xff]
                  %344 = vst [vmem:[%s330 + $0x30] sm:$0xff] %v343
                  %v345 = vld [vmem:[%s329 + $0x70] sm:$0xff]
                  %346 = vst [vmem:[%s330 + $0x38] sm:$0xff] %v345
                  %v347 = vld [vmem:[%s329 + $0x80] sm:$0xff]
                  %348 = vst [vmem:[%s330 + $0x40] sm:$0xff] %v347
                  %v349 = vld [vmem:[%s329 + $0x90] sm:$0xff]
                  %350 = vst [vmem:[%s330 + $0x48] sm:$0xff] %v349
                  %v351 = vld [vmem:[%s329 + $0xa0] sm:$0xff]
                  %352 = vst [vmem:[%s330 + $0x50] sm:$0xff] %v351
                  %v353 = vld [vmem:[%s329 + $0xb0] sm:$0xff]
                  %354 = vst [vmem:[%s330 + $0x58] sm:$0xff] %v353
                  %v355 = vld [vmem:[%s329 + $0xc0] sm:$0xff]
                  %356 = vst [vmem:[%s330 + $0x60] sm:$0xff] %v355
                  %v357 = vld [vmem:[%s329 + $0xd0] sm:$0xff]
                  %358 = vst [vmem:[%s330 + $0x68] sm:$0xff] %v357
                  %v359 = vld [vmem:[%s329 + $0xe0] sm:$0xff]
                  %360 = vst [vmem:[%s330 + $0x70] sm:$0xff] %v359
                  %v361 = vld [vmem:[%s329 + $0xf0] sm:$0xff]
                  %362 = vst [vmem:[%s330 + $0x78] sm:$0xff] %v361
                  %v363 = vld [vmem:[%s329 + $0x100] sm:$0xff]
                  %364 = vst [vmem:[%s330 + $0x80] sm:$0xff] %v363
                  %v365 = vld [vmem:[%s329 + $0x110] sm:$0xff]
                  %366 = vst [vmem:[%s330 + $0x88] sm:$0xff] %v365
                  %v367 = vld [vmem:[%s329 + $0x120] sm:$0xff]
                  %368 = vst [vmem:[%s330 + $0x90] sm:$0xff] %v367
                  %v369 = vld [vmem:[%s329 + $0x130] sm:$0xff]
                  %370 = vst [vmem:[%s330 + $0x98] sm:$0xff] %v369
                  %v371 = vld [vmem:[%s329 + $0x140] sm:$0xff]
                  %372 = vst [vmem:[%s330 + $0xa0] sm:$0xff] %v371
                  %v373 = vld [vmem:[%s329 + $0x150] sm:$0xff]
                  %374 = vst [vmem:[%s330 + $0xa8] sm:$0xff] %v373
                  %v375 = vld [vmem:[%s329 + $0x160] sm:$0xff]
                  %376 = vst [vmem:[%s330 + $0xb0] sm:$0xff] %v375
                  %v377 = vld [vmem:[%s329 + $0x170] sm:$0xff]
                  %378 = vst [vmem:[%s330 + $0xb8] sm:$0xff] %v377
                  %v379 = vld [vmem:[%s329 + $0x180] sm:$0xff]
                  %380 = vst [vmem:[%s330 + $0xc0] sm:$0xff] %v379
                  %v381 = vld [vmem:[%s329 + $0x190] sm:$0xff]
                  %382 = vst [vmem:[%s330 + $0xc8] sm:$0xff] %v381
                  %v383 = vld [vmem:[%s329 + $0x1a0] sm:$0xff]
                  %384 = vst [vmem:[%s330 + $0xd0] sm:$0xff] %v383
                  %v385 = vld [vmem:[%s329 + $0x1b0] sm:$0xff]
                  %386 = vst [vmem:[%s330 + $0xd8] sm:$0xff] %v385
                  %v387 = vld [vmem:[%s329 + $0x1c0] sm:$0xff]
                  %388 = vst [vmem:[%s330 + $0xe0] sm:$0xff] %v387
                  %v389 = vld [vmem:[%s329 + $0x1d0] sm:$0xff]
                  %390 = vst [vmem:[%s330 + $0xe8] sm:$0xff] %v389
                  %v391 = vld [vmem:[%s329 + $0x1e0] sm:$0xff]
                  %392 = vst [vmem:[%s330 + $0xf0] sm:$0xff] %v391
                  %v393 = vld [vmem:[%s329 + $0x1f0] sm:$0xff]
                  %394 = vst [vmem:[%s330 + $0xf8] sm:$0xff] %v393
                $region72: #{classification_cnn_forward.1} parent=66 // loop_footer
                  %s328 = sadd.s32 1, %s324
                $region73: #{classification_cnn_forward.1} parent=66 // loop_footer_branch
                  %323 = sbr.rel target = $region69
                $region74: #{classification_cnn_forward.1} parent=66 // loop_exit
                  _
              $region67: #{classification_cnn_forward.1} parent=51 // pred_fallthru
                _
              // Predicated region
              $region75: #{classification_cnn_forward.1} parent=51 // pred_check
                _
              $region76: #{classification_cnn_forward.1} parent=51 // pred_check_branch
                %396 = sbr.rel target = $region78
              $region77: #{classification_cnn_forward.1} parent=51 // pred_region
                _
              $region78: #{classification_cnn_forward.1} parent=51 // pred_fallthru
                _
            $region52: #{classification_cnn_forward.1} parent=47 // pred_fallthru
              _
            // Predicated region
            $region53: #{classification_cnn_forward.1} parent=47 // pred_check
              _
            $region54: #{classification_cnn_forward.1} parent=47 // pred_check_branch
              %246 = sbr.rel target = $region56
            $region55: #{classification_cnn_forward.1} parent=47 // pred_region
              %s248 = ssub.s32 256, 1
              loop: start=0, step=1, limit=1
              $region57: #{classification_cnn_forward.1} parent=55 // loop_pre_header
                _
              $region58: #{classification_cnn_forward.1} parent=55 // loop_header
                %s250 = sphi 0, %s254
                %p251 = scmp.ge.s32.totalorder %s250, 1
                %s255 = sphi %s240, %s240
                %s256 = sphi %s237, %s237
              $region59: #{classification_cnn_forward.1} parent=55 // loop_header_branch
                %253 = sbr.rel (%p251) target = $region63
              $region60: #{classification_cnn_forward.1} parent=55 // loop_body
                %v257 = vld [vmem:[%s255] sm:%s248]
                %258 = vst [vmem:[%s256] sm:%s248] %v257
                %v259 = vld [vmem:[%s255 + $0x10] sm:%s248]
                %260 = vst [vmem:[%s256 + $0x8] sm:%s248] %v259
                %v261 = vld [vmem:[%s255 + $0x20] sm:%s248]
                %262 = vst [vmem:[%s256 + $0x10] sm:%s248] %v261
                %v263 = vld [vmem:[%s255 + $0x30] sm:%s248]
                %264 = vst [vmem:[%s256 + $0x18] sm:%s248] %v263
                %v265 = vld [vmem:[%s255 + $0x40] sm:%s248]
                %266 = vst [vmem:[%s256 + $0x20] sm:%s248] %v265
                %v267 = vld [vmem:[%s255 + $0x50] sm:%s248]
                %268 = vst [vmem:[%s256 + $0x28] sm:%s248] %v267
                %v269 = vld [vmem:[%s255 + $0x60] sm:%s248]
                %270 = vst [vmem:[%s256 + $0x30] sm:%s248] %v269
                %v271 = vld [vmem:[%s255 + $0x70] sm:%s248]
                %272 = vst [vmem:[%s256 + $0x38] sm:%s248] %v271
                %v273 = vld [vmem:[%s255 + $0x80] sm:%s248]
                %274 = vst [vmem:[%s256 + $0x40] sm:%s248] %v273
                %v275 = vld [vmem:[%s255 + $0x90] sm:%s248]
                %276 = vst [vmem:[%s256 + $0x48] sm:%s248] %v275
                %v277 = vld [vmem:[%s255 + $0xa0] sm:%s248]
                %278 = vst [vmem:[%s256 + $0x50] sm:%s248] %v277
                %v279 = vld [vmem:[%s255 + $0xb0] sm:%s248]
                %280 = vst [vmem:[%s256 + $0x58] sm:%s248] %v279
                %v281 = vld [vmem:[%s255 + $0xc0] sm:%s248]
                %282 = vst [vmem:[%s256 + $0x60] sm:%s248] %v281
                %v283 = vld [vmem:[%s255 + $0xd0] sm:%s248]
                %284 = vst [vmem:[%s256 + $0x68] sm:%s248] %v283
                %v285 = vld [vmem:[%s255 + $0xe0] sm:%s248]
                %286 = vst [vmem:[%s256 + $0x70] sm:%s248] %v285
                %v287 = vld [vmem:[%s255 + $0xf0] sm:%s248]
                %288 = vst [vmem:[%s256 + $0x78] sm:%s248] %v287
                %v289 = vld [vmem:[%s255 + $0x100] sm:%s248]
                %290 = vst [vmem:[%s256 + $0x80] sm:%s248] %v289
                %v291 = vld [vmem:[%s255 + $0x110] sm:%s248]
                %292 = vst [vmem:[%s256 + $0x88] sm:%s248] %v291
                %v293 = vld [vmem:[%s255 + $0x120] sm:%s248]
                %294 = vst [vmem:[%s256 + $0x90] sm:%s248] %v293
                %v295 = vld [vmem:[%s255 + $0x130] sm:%s248]
                %296 = vst [vmem:[%s256 + $0x98] sm:%s248] %v295
                %v297 = vld [vmem:[%s255 + $0x140] sm:%s248]
                %298 = vst [vmem:[%s256 + $0xa0] sm:%s248] %v297
                %v299 = vld [vmem:[%s255 + $0x150] sm:%s248]
                %300 = vst [vmem:[%s256 + $0xa8] sm:%s248] %v299
                %v301 = vld [vmem:[%s255 + $0x160] sm:%s248]
                %302 = vst [vmem:[%s256 + $0xb0] sm:%s248] %v301
                %v303 = vld [vmem:[%s255 + $0x170] sm:%s248]
                %304 = vst [vmem:[%s256 + $0xb8] sm:%s248] %v303
                %v305 = vld [vmem:[%s255 + $0x180] sm:%s248]
                %306 = vst [vmem:[%s256 + $0xc0] sm:%s248] %v305
                %v307 = vld [vmem:[%s255 + $0x190] sm:%s248]
                %308 = vst [vmem:[%s256 + $0xc8] sm:%s248] %v307
                %v309 = vld [vmem:[%s255 + $0x1a0] sm:%s248]
                %310 = vst [vmem:[%s256 + $0xd0] sm:%s248] %v309
                %v311 = vld [vmem:[%s255 + $0x1b0] sm:%s248]
                %312 = vst [vmem:[%s256 + $0xd8] sm:%s248] %v311
                %v313 = vld [vmem:[%s255 + $0x1c0] sm:%s248]
                %314 = vst [vmem:[%s256 + $0xe0] sm:%s248] %v313
                %v315 = vld [vmem:[%s255 + $0x1d0] sm:%s248]
                %316 = vst [vmem:[%s256 + $0xe8] sm:%s248] %v315
                %v317 = vld [vmem:[%s255 + $0x1e0] sm:%s248]
                %318 = vst [vmem:[%s256 + $0xf0] sm:%s248] %v317
                %v319 = vld [vmem:[%s255 + $0x1f0] sm:%s248]
                %320 = vst [vmem:[%s256 + $0xf8] sm:%s248] %v319
              $region61: #{classification_cnn_forward.1} parent=55 // loop_footer
                %s254 = sadd.s32 1, %s250
              $region62: #{classification_cnn_forward.1} parent=55 // loop_footer_branch
                %249 = sbr.rel target = $region58
              $region63: #{classification_cnn_forward.1} parent=55 // loop_exit
                _
            $region56: #{classification_cnn_forward.1} parent=47 // pred_fallthru
              _
          $region48: #{classification_cnn_forward.1} parent=43 // pred_fallthru
            _
          %397 = vnop
        $region44: #{classification_cnn_forward.1} parent=39 // pred_fallthru
          _
      $region40: #{classification_cnn_forward.1} parent=5 // pred_fallthru
        _
      %p398 = scmp.le.s32.totalorder 1, %s16
      %p399 = scmp.lt.s32.totalorder %s16, 3
      %p400 = pnand %p398, %p399
      %p401 = pneg %p400
      // Predicated region
      $region79: #{classification_cnn_forward.1} parent=5 // pred_check
        _
      $region80: #{classification_cnn_forward.1} parent=5 // pred_check_branch
        %403 = sbr.rel (%p400) target = $region82
      $region81: #{classification_cnn_forward.1} parent=5 // pred_region
        %s404 = ssub.s32 %s16, 1
        %s405 = sand.u32 %s29, 1
        %s406 = sand.u32 %s29, 1
        %s407 = smul.addr %s406, 256
        %s408 = scalar_lea.vmem [#allocation3], %s407
        // Predicated region
        $region83: #{classification_cnn_forward.1} parent=81 // pred_check
          %p409 = pneg %p42
        $region84: #{classification_cnn_forward.1} parent=81 // pred_check_branch
          %411 = sbr.rel (%p409) target = $region86
        $region85: #{classification_cnn_forward.1} parent=81 // pred_region
          _
        $region86: #{classification_cnn_forward.1} parent=81 // pred_fallthru
          _
        %s412 = sand.u32 %s29, 1
        %s413 = sand.u32 %s29, 1
        %s414 = smul.addr %s413, 256
        %s415 = scalar_lea.vmem [#allocation3], %s414
        %p416 = pneg %p42
        %p417 = pneg %p39
        %p418 = pneg %p63
        %p419 = pneg %p60
        %p420 = pneg %p84
        %p421 = pneg %p81
        %p422 = pneg %p105
        %p423 = pneg %p102
        %p424 = pneg %p126
        %p425 = pneg %p123
        %p426 = pneg %p147
        %p427 = pneg %p144
        %p428 = pneg %p168
        %p429 = pneg %p165
        %p430 = pneg %p194
        %p431 = pneg %p191
        %s432 = sand.u32 %s181, 1
        %s433 = scalar_lea.sflag [#allocation5], %s432
        %s434 = sand.u32 %s181, 1
        %s435 = scalar_lea.vmem [#allocation4], %s434
        %s436 = smul.u32 2, %s21
        %v437 = vld [vmem:[%s1] sm:$0xff]
        %v438 = vld [vmem:[%s408] sm:$0xff]
        %v439 = vld [vmem:[%s408 + $0x8] sm:$0xff]
        %v440 = vld [vmem:[%s408 + $0x10] sm:$0xff]
        %v441 = vld [vmem:[%s408 + $0x18] sm:$0xff]
        %v442 = vld [vmem:[%s408 + $0x20] sm:$0xff]
        %v443 = vld [vmem:[%s408 + $0x28] sm:$0xff]
        %v444 = vld [vmem:[%s408 + $0x30] sm:$0xff]
        %v445 = vld [vmem:[%s408 + $0x38] sm:$0xff]
        %v446 = vld [vmem:[%s408 + $0x40] sm:$0xff]
        %v447 = vld [vmem:[%s408 + $0x48] sm:$0xff]
        %v448 = vld [vmem:[%s408 + $0x50] sm:$0xff]
        %v449 = vld [vmem:[%s408 + $0x58] sm:$0xff]
        %v450 = vld [vmem:[%s408 + $0x60] sm:$0xff]
        %v451 = vld [vmem:[%s408 + $0x68] sm:$0xff]
        %v452 = vld [vmem:[%s408 + $0x70] sm:$0xff]
        %v453 = vld [vmem:[%s408 + $0x78] sm:$0xff]
        %v454 = vld [vmem:[%s408 + $0x80] sm:$0xff]
        %v455 = vld [vmem:[%s408 + $0x88] sm:$0xff]
        %v456 = vld [vmem:[%s408 + $0x90] sm:$0xff]
        %v457 = vld [vmem:[%s408 + $0x98] sm:$0xff]
        %v458 = vld [vmem:[%s408 + $0xa0] sm:$0xff]
        %v459 = vld [vmem:[%s408 + $0xa8] sm:$0xff]
        %v460 = vld [vmem:[%s408 + $0xb0] sm:$0xff]
        %v461 = vld [vmem:[%s408 + $0xb8] sm:$0xff]
        %v462 = vld [vmem:[%s408 + $0xc0] sm:$0xff]
        %v463 = vld [vmem:[%s408 + $0xc8] sm:$0xff]
        %v464 = vld [vmem:[%s408 + $0xd0] sm:$0xff]
        %v465 = vld [vmem:[%s408 + $0xd8] sm:$0xff]
        %v466 = vld [vmem:[%s408 + $0xe0] sm:$0xff]
        %v467 = vld [vmem:[%s408 + $0xe8] sm:$0xff]
        %v468 = vld [vmem:[%s408 + $0xf0] sm:$0xff]
        %v469 = vld [vmem:[%s408 + $0xf8] sm:$0xff]
        %v471 = vunpack.c.l.b16 %v437
        %v472 = vunpack.c.h.b16 %v437
        %v473 = vpack.c.b16 %v471, %v471
        %v474 = vpack.c.b16 %v472, %v472
        %v509 = vunpack.c.l.b16 %v438
        %v510 = vunpack.c.h.b16 %v438
        %v511 = vunpack.c.l.b16 %v439
        %v512 = vunpack.c.h.b16 %v439
        %v513 = vunpack.c.l.b16 %v440
        %v514 = vunpack.c.h.b16 %v440
        %v515 = vunpack.c.l.b16 %v441
        %v516 = vunpack.c.h.b16 %v441
        %v517 = vunpack.c.l.b16 %v442
        %v518 = vunpack.c.h.b16 %v442
        %v519 = vunpack.c.l.b16 %v443
        %v520 = vunpack.c.h.b16 %v443
        %v521 = vunpack.c.l.b16 %v444
        %v522 = vunpack.c.h.b16 %v444
        %v523 = vunpack.c.l.b16 %v445
        %v524 = vunpack.c.h.b16 %v445
        %v525 = vunpack.c.l.b16 %v446
        %v526 = vunpack.c.h.b16 %v446
        %v527 = vunpack.c.l.b16 %v447
        %v528 = vunpack.c.h.b16 %v447
        %v529 = vunpack.c.l.b16 %v448
        %v530 = vunpack.c.h.b16 %v448
        %v531 = vunpack.c.l.b16 %v449
        %v532 = vunpack.c.h.b16 %v449
        %v533 = vunpack.c.l.b16 %v450
        %v534 = vunpack.c.h.b16 %v450
        %v535 = vunpack.c.l.b16 %v451
        %v536 = vunpack.c.h.b16 %v451
        %v537 = vunpack.c.l.b16 %v452
        %v538 = vunpack.c.h.b16 %v452
        %v539 = vunpack.c.l.b16 %v453
        %v540 = vunpack.c.h.b16 %v453
        %v541 = vunpack.c.l.b16 %v454
        %v542 = vunpack.c.h.b16 %v454
        %v543 = vunpack.c.l.b16 %v455
        %v544 = vunpack.c.h.b16 %v455
        %v545 = vunpack.c.l.b16 %v456
        %v546 = vunpack.c.h.b16 %v456
        %v547 = vunpack.c.l.b16 %v457
        %v548 = vunpack.c.h.b16 %v457
        %v549 = vunpack.c.l.b16 %v458
        %v550 = vunpack.c.h.b16 %v458
        %v551 = vunpack.c.l.b16 %v459
        %v552 = vunpack.c.h.b16 %v459
        %v553 = vunpack.c.l.b16 %v460
        %v554 = vunpack.c.h.b16 %v460
        %v555 = vunpack.c.l.b16 %v461
        %v556 = vunpack.c.h.b16 %v461
        %v557 = vunpack.c.l.b16 %v462
        %v558 = vunpack.c.h.b16 %v462
        %v559 = vunpack.c.l.b16 %v463
        %v560 = vunpack.c.h.b16 %v463
        %v561 = vunpack.c.l.b16 %v464
        %v562 = vunpack.c.h.b16 %v464
        %v563 = vunpack.c.l.b16 %v465
        %v564 = vunpack.c.h.b16 %v465
        %v565 = vunpack.c.l.b16 %v466
        %v566 = vunpack.c.h.b16 %v466
        %v567 = vunpack.c.l.b16 %v467
        %v568 = vunpack.c.h.b16 %v467
        %v569 = vunpack.c.l.b16 %v468
        %v570 = vunpack.c.h.b16 %v468
        %v571 = vunpack.c.l.b16 %v469
        %v572 = vunpack.c.h.b16 %v469
        %v573 = vpack.c.b16 %v511, %v509
        %v574 = vpack.c.b16 %v512, %v510
        %v575 = vpack.c.b16 %v515, %v513
        %v576 = vpack.c.b16 %v516, %v514
        %v577 = vpack.c.b16 %v519, %v517
        %v578 = vpack.c.b16 %v520, %v518
        %v579 = vpack.c.b16 %v523, %v521
        %v580 = vpack.c.b16 %v524, %v522
        %v581 = vpack.c.b16 %v527, %v525
        %v582 = vpack.c.b16 %v528, %v526
        %v583 = vpack.c.b16 %v531, %v529
        %v584 = vpack.c.b16 %v532, %v530
        %v585 = vpack.c.b16 %v535, %v533
        %v586 = vpack.c.b16 %v536, %v534
        %v587 = vpack.c.b16 %v539, %v537
        %v588 = vpack.c.b16 %v540, %v538
        %v589 = vpack.c.b16 %v543, %v541
        %v590 = vpack.c.b16 %v544, %v542
        %v591 = vpack.c.b16 %v547, %v545
        %v592 = vpack.c.b16 %v548, %v546
        %v593 = vpack.c.b16 %v551, %v549
        %v594 = vpack.c.b16 %v552, %v550
        %v595 = vpack.c.b16 %v555, %v553
        %v596 = vpack.c.b16 %v556, %v554
        %v597 = vpack.c.b16 %v559, %v557
        %v598 = vpack.c.b16 %v560, %v558
        %v599 = vpack.c.b16 %v563, %v561
        %v600 = vpack.c.b16 %v564, %v562
        %v601 = vpack.c.b16 %v567, %v565
        %v602 = vpack.c.b16 %v568, %v566
        %v603 = vpack.c.b16 %v571, %v569
        %v604 = vpack.c.b16 %v572, %v570
        %637 = vmatprep.subr.bf16.mxu0 %v588
        %638 = vmatpush1.bf16.msra.mxu0 %v587
        %639 = vmatprep.subr.bf16.mxu0 %v586
        %640 = vmatpush1.bf16.msra.mxu0 %v585
        %641 = vmatprep.subr.bf16.mxu0 %v584
        %642 = vmatpush1.bf16.msra.mxu0 %v583
        %643 = vmatprep.subr.bf16.mxu0 %v582
        %644 = vmatpush1.bf16.msra.mxu0 %v581
        %645 = vmatprep.subr.bf16.mxu0 %v580
        %646 = vmatpush1.bf16.msra.mxu0 %v579
        %647 = vmatprep.subr.bf16.mxu0 %v578
        %648 = vmatpush1.bf16.msra.mxu0 %v577
        %649 = vmatprep.subr.bf16.mxu0 %v576
        %650 = vmatpush1.bf16.msra.mxu0 %v575
        %651 = vmatprep.subr.bf16.mxu0 %v574
        %652 = vmatpush1.bf16.msra.mxu0 %v573
        %653 = vmatprep.subr.bf16.mxu0 %v604
        %654 = vmatpush2.bf16.msra.mxu0 %v603
        %655 = vmatprep.subr.bf16.mxu0 %v602
        %656 = vmatpush2.bf16.msra.mxu0 %v601
        %657 = vmatprep.subr.bf16.mxu0 %v600
        %658 = vmatpush2.bf16.msra.mxu0 %v599
        %659 = vmatprep.subr.bf16.mxu0 %v598
        %660 = vmatpush2.bf16.msra.mxu0 %v597
        %661 = vmatprep.subr.bf16.mxu0 %v596
        %662 = vmatpush2.bf16.msra.mxu0 %v595
        %663 = vmatprep.subr.bf16.mxu0 %v594
        %664 = vmatpush2.bf16.msra.mxu0 %v593
        %665 = vmatprep.subr.bf16.mxu0 %v592
        %666 = vmatpush2.bf16.msra.mxu0 %v591
        %667 = vmatprep.subr.bf16.mxu0 %v590
        %668 = vmatpush2.bf16.msra.mxu0 %v589
        %669 = vmatprep.mubr.bf16.mxu0 %v474
        %670 = vmatmul.mubr.bf16.gmra.mxu0 %v473
        %v671 = vpop.f32.mrf.mxu0
        %v672 = vadd.f32 0.0, %v671
        %v673 = vpop.f32.mrf.mxu0
        %v674 = vadd.f32 0.0, %v673
        %v675 = vpop.f32.mrf.mxu0
        %v676 = vpop.f32.mrf.mxu0
        %677 = vdwg.mxu0
        %679 = vrot.lane.b32.xlu0 %v672, 64
        %v680 = vpop.permute.xlu0 %679
        %v682 = vmax.f32 %v672, %v680
        %v683 = vmax.f32 %v682, %v674
        %685 = vrot.lane.b32.xlu0 %v674, 64
        %v686 = vpop.permute.xlu0 %685
        %v688 = vmax.f32 %v683, %v686
        %v689 = vld [vmem:[%s2] sm:$0xff]
        %691 = vset.pattern.permute.xlu0 0
        %692 = vperm.xlu0 %691, %v689
        %v693 = vpop.permute.xlu0 %692
        %v695 = vadd.f32 %v688, %v693
        %v696 = vmax.f32 %v695, 0.0
        %v697 = vlaneseq
        %vm698 = vcmp.ge.s32.totalorder %v697, 0
        %vm699 = vcmp.lt.s32.totalorder %v697, 64
        %vm700 = vmand %vm698, %vm699
        %701 = vst.msk [vmem:[#allocation2] sm:$0x1] %vm700, %v696
        %v704 = vunpack.c.l.s4 1966171168
        %v705 = vunpack.c.0.s8 %v704
        %v706 = vlaneseq
        %v707 = vshrl.u32 %v706, 7
        %v708 = vsub.s32 %v705, %v707
        %v709 = vrot.slane %v696, %v708
        %v710 = vcombine.high %v709, %v709
        %v712 = vunpack.c.l.s4 1966171168
        %v713 = vunpack.c.0.s8 %v712
        %v714 = vlaneseq
        %v715 = vshrl.u32 %v714, 7
        %v716 = vsub.s32 %v713, %v715
        %v717 = vrot.slane %v709, %v716
        %v719 = vunpack.c.l.s4 1966171168
        %v720 = vunpack.c.0.s8 %v719
        %v721 = vlaneseq
        %v722 = vshrl.u32 %v721, 7
        %v723 = vsub.s32 %v720, %v722
        %v724 = vrot.slane %v710, %v723
        %725 = vrot.lane.b32.xlu0 %v724, 64
        %v726 = vpop.permute.xlu0 %725
        %vm728 = vcmp.ge.s32.totalorder %v697, 64
        %vm729 = vcmp.lt.s32.totalorder %v697, 128
        %vm730 = vmand %vm728, %vm729
        %731 = vst.msk [vmem:[#allocation2] sm:$0x1] %vm730, %v726
        %v732 = vcombine.high %v717, %v717
        %734 = vst.msk [vmem:[#allocation2 + $0x1] sm:$0x1] %vm700, %v732
        %v735 = vcombine.high %v724, %v724
        %736 = vrot.lane.b32.xlu0 %v735, 64
        %v737 = vpop.permute.xlu0 %736
        %739 = vst.msk [vmem:[#allocation2 + $0x1] sm:$0x1] %vm730, %v737
        %v740 = vcombine.high %v696, %v696
        %v742 = vunpack.c.l.s4 1966171168
        %v743 = vunpack.c.0.s8 %v742
        %v744 = vlaneseq
        %v745 = vshrl.u32 %v744, 7
        %v746 = vsub.s32 %v743, %v745
        %v747 = vrot.slane %v740, %v746
        %v749 = vunpack.c.l.s4 1966171168
        %v750 = vunpack.c.0.s8 %v749
        %v751 = vlaneseq
        %v752 = vshrl.u32 %v751, 7
        %v753 = vsub.s32 %v750, %v752
        %v754 = vrot.slane %v747, %v753
        %756 = vst.msk [vmem:[#allocation2 + $0x2] sm:$0x1] %vm700, %v754
        %v757 = vcombine.high %v747, %v747
        %v759 = vunpack.c.l.s4 1966171168
        %v760 = vunpack.c.0.s8 %v759
        %v761 = vlaneseq
        %v762 = vshrl.u32 %v761, 7
        %v763 = vsub.s32 %v760, %v762
        %v764 = vrot.slane %v757, %v763
        %765 = vrot.lane.b32.xlu0 %v764, 64
        %v766 = vpop.permute.xlu0 %765
        %768 = vst.msk [vmem:[#allocation2 + $0x2] sm:$0x1] %vm730, %v766
        %v769 = vcombine.high %v754, %v754
        %771 = vst.msk [vmem:[#allocation2 + $0x3] sm:$0x1] %vm700, %v769
        %v772 = vcombine.high %v764, %v764
        %773 = vrot.lane.b32.xlu0 %v772, 64
        %v774 = vpop.permute.xlu0 %773
        %776 = vst.msk [vmem:[#allocation2 + $0x3] sm:$0x1] %vm730, %v774
        %v777 = vld [vmem:[#allocation2] sm:$0xf]
        %v778 = vld [vmem:[%s3] sm:$0xff]
        %v779 = vld [vmem:[%s3 + $0x8] sm:$0xff]
        %v780 = vld [vmem:[%s3 + $0x10] sm:$0xff]
        %v781 = vld [vmem:[%s3 + $0x18] sm:$0xff]
        %v782 = vld [vmem:[%s3 + $0x20] sm:$0xff]
        %v783 = vld [vmem:[%s3 + $0x28] sm:$0xff]
        %v784 = vld [vmem:[%s3 + $0x30] sm:$0xff]
        %v785 = vld [vmem:[%s3 + $0x38] sm:$0xff]
        %v786 = vld [vmem:[%s3 + $0x40] sm:$0xff]
        %v787 = vld [vmem:[%s3 + $0x48] sm:$0xff]
        %v788 = vld [vmem:[%s3 + $0x50] sm:$0xff]
        %v789 = vld [vmem:[%s3 + $0x58] sm:$0xff]
        %v790 = vld [vmem:[%s3 + $0x60] sm:$0xff]
        %v791 = vld [vmem:[%s3 + $0x68] sm:$0xff]
        %v792 = vld [vmem:[%s3 + $0x70] sm:$0xff]
        %v793 = vld [vmem:[%s3 + $0x78] sm:$0xff]
        %v794 = vld [vmem:[%s3 + $0x80] sm:$0xff]
        %v795 = vld [vmem:[%s3 + $0x88] sm:$0xff]
        %v796 = vld [vmem:[%s3 + $0x90] sm:$0xff]
        %v797 = vld [vmem:[%s3 + $0x98] sm:$0xff]
        %v798 = vld [vmem:[%s3 + $0xa0] sm:$0xff]
        %v799 = vld [vmem:[%s3 + $0xa8] sm:$0xff]
        %v800 = vld [vmem:[%s3 + $0xb0] sm:$0xff]
        %v801 = vld [vmem:[%s3 + $0xb8] sm:$0xff]
        %v802 = vld [vmem:[%s3 + $0xc0] sm:$0xff]
        %v803 = vld [vmem:[%s3 + $0xc8] sm:$0xff]
        %v804 = vld [vmem:[%s3 + $0xd0] sm:$0xff]
        %v805 = vld [vmem:[%s3 + $0xd8] sm:$0xff]
        %v806 = vld [vmem:[%s3 + $0xe0] sm:$0xff]
        %v807 = vld [vmem:[%s3 + $0xe8] sm:$0xff]
        %v808 = vld [vmem:[%s3 + $0xf0] sm:$0xff]
        %v809 = vld [vmem:[%s3 + $0xf8] sm:$0xff]
        %v810 = vld [vmem:[%s3 + $0x100] sm:$0xff]
        %v811 = vld [vmem:[%s3 + $0x108] sm:$0xff]
        %v812 = vld [vmem:[%s3 + $0x110] sm:$0xff]
        %v813 = vld [vmem:[%s3 + $0x118] sm:$0xff]
        %v814 = vld [vmem:[%s3 + $0x120] sm:$0xff]
        %v815 = vld [vmem:[%s3 + $0x128] sm:$0xff]
        %v816 = vld [vmem:[%s3 + $0x130] sm:$0xff]
        %v817 = vld [vmem:[%s3 + $0x138] sm:$0xff]
        %v818 = vld [vmem:[%s3 + $0x140] sm:$0xff]
        %v819 = vld [vmem:[%s3 + $0x148] sm:$0xff]
        %v820 = vld [vmem:[%s3 + $0x150] sm:$0xff]
        %v821 = vld [vmem:[%s3 + $0x158] sm:$0xff]
        %v822 = vld [vmem:[%s3 + $0x160] sm:$0xff]
        %v823 = vld [vmem:[%s3 + $0x168] sm:$0xff]
        %v824 = vld [vmem:[%s3 + $0x170] sm:$0xff]
        %v825 = vld [vmem:[%s3 + $0x178] sm:$0xff]
        %v826 = vld [vmem:[%s3 + $0x180] sm:$0xff]
        %v827 = vld [vmem:[%s3 + $0x188] sm:$0xff]
        %v828 = vld [vmem:[%s3 + $0x190] sm:$0xff]
        %v829 = vld [vmem:[%s3 + $0x198] sm:$0xff]
        %v830 = vld [vmem:[%s3 + $0x1a0] sm:$0xff]
        %v831 = vld [vmem:[%s3 + $0x1a8] sm:$0xff]
        %v832 = vld [vmem:[%s3 + $0x1b0] sm:$0xff]
        %v833 = vld [vmem:[%s3 + $0x1b8] sm:$0xff]
        %v834 = vld [vmem:[%s3 + $0x1c0] sm:$0xff]
        %v835 = vld [vmem:[%s3 + $0x1c8] sm:$0xff]
        %v836 = vld [vmem:[%s3 + $0x1d0] sm:$0xff]
        %v837 = vld [vmem:[%s3 + $0x1d8] sm:$0xff]
        %v838 = vld [vmem:[%s3 + $0x1e0] sm:$0xff]
        %v839 = vld [vmem:[%s3 + $0x1e8] sm:$0xff]
        %v840 = vld [vmem:[%s3 + $0x1f0] sm:$0xff]
        %v841 = vld [vmem:[%s3 + $0x1f8] sm:$0xff]
        %v842 = vld [vmem:[%s4] sm:$0x1]
        %v844 = vlaneseq
        %v845 = vshrl.u32 %v844, 7
        %v846 = vsub.s32 0, %v845
        %v847 = vrot.slane %v777, %v846
        %v848 = vlaneseq
        %v849 = vshrl.u32 %v848, 7
        %v850 = vsub.s32 1, %v849
        %v851 = vrot.slane %v777, %v850
        %v852 = vlaneseq
        %v853 = vshrl.u32 %v852, 7
        %v854 = vsub.s32 2, %v853
        %v855 = vrot.slane %v777, %v854
        %v856 = vlaneseq
        %v857 = vshrl.u32 %v856, 7
        %v858 = vsub.s32 3, %v857
        %v859 = vrot.slane %v777, %v858
        %864 = vmatprep.subr.mxu0 0.0
        %865 = vmatpush1.msra.mxu0 %v793
        %866 = vmatprep.subr.mxu0 0.0
        %867 = vmatpush1.msra.mxu0 %v792
        %868 = vmatprep.subr.mxu0 0.0
        %869 = vmatpush1.msra.mxu0 %v791
        %870 = vmatprep.subr.mxu0 0.0
        %871 = vmatpush1.msra.mxu0 %v790
        %872 = vmatprep.subr.mxu0 0.0
        %873 = vmatpush1.msra.mxu0 %v789
        %874 = vmatprep.subr.mxu0 0.0
        %875 = vmatpush1.msra.mxu0 %v788
        %876 = vmatprep.subr.mxu0 0.0
        %877 = vmatpush1.msra.mxu0 %v787
        %878 = vmatprep.subr.mxu0 0.0
        %879 = vmatpush1.msra.mxu0 %v786
        %880 = vmatprep.subr.mxu0 0.0
        %881 = vmatpush1.msra.mxu0 %v785
        %882 = vmatprep.subr.mxu0 0.0
        %883 = vmatpush1.msra.mxu0 %v784
        %884 = vmatprep.subr.mxu0 0.0
        %885 = vmatpush1.msra.mxu0 %v783
        %886 = vmatprep.subr.mxu0 0.0
        %887 = vmatpush1.msra.mxu0 %v782
        %888 = vmatprep.subr.mxu0 0.0
        %889 = vmatpush1.msra.mxu0 %v781
        %890 = vmatprep.subr.mxu0 0.0
        %891 = vmatpush1.msra.mxu0 %v780
        %892 = vmatprep.subr.mxu0 0.0
        %893 = vmatpush1.msra.mxu0 %v779
        %894 = vmatprep.subr.mxu0 0.0
        %895 = vmatpush1.msra.mxu0 %v778
        %896 = vmatprep.subr.mxu0 0.0
        %897 = vmatpush2.msra.mxu0 %v809
        %898 = vmatprep.subr.mxu0 0.0
        %899 = vmatpush2.msra.mxu0 %v808
        %900 = vmatprep.subr.mxu0 0.0
        %901 = vmatpush2.msra.mxu0 %v807
        %902 = vmatprep.subr.mxu0 0.0
        %903 = vmatpush2.msra.mxu0 %v806
        %904 = vmatprep.subr.mxu0 0.0
        %905 = vmatpush2.msra.mxu0 %v805
        %906 = vmatprep.subr.mxu0 0.0
        %907 = vmatpush2.msra.mxu0 %v804
        %908 = vmatprep.subr.mxu0 0.0
        %909 = vmatpush2.msra.mxu0 %v803
        %910 = vmatprep.subr.mxu0 0.0
        %911 = vmatpush2.msra.mxu0 %v802
        %912 = vmatprep.subr.mxu0 0.0
        %913 = vmatpush2.msra.mxu0 %v801
        %914 = vmatprep.subr.mxu0 0.0
        %915 = vmatpush2.msra.mxu0 %v800
        %916 = vmatprep.subr.mxu0 0.0
        %917 = vmatpush2.msra.mxu0 %v799
        %918 = vmatprep.subr.mxu0 0.0
        %919 = vmatpush2.msra.mxu0 %v798
        %920 = vmatprep.subr.mxu0 0.0
        %921 = vmatpush2.msra.mxu0 %v797
        %922 = vmatprep.subr.mxu0 0.0
        %923 = vmatpush2.msra.mxu0 %v796
        %924 = vmatprep.subr.mxu0 0.0
        %925 = vmatpush2.msra.mxu0 %v795
        %926 = vmatprep.subr.mxu0 0.0
        %927 = vmatpush2.msra.mxu0 %v794
        %928 = vmatprep.mubr.f32.mxu0 %v851
        %929 = vmatmul.mubr.f32.gmra.mxu0 %v847
        %v930 = vpop.f32.mrf.mxu0
        %v931 = vadd.f32 %v842, %v930
        %v932 = vpop.f32.mrf.mxu0
        %933 = vdwg.mxu0
        %934 = vmatprep.subr.mxu0 0.0
        %935 = vmatpush1.msra.mxu0 %v825
        %936 = vmatprep.subr.mxu0 0.0
        %937 = vmatpush1.msra.mxu0 %v824
        %938 = vmatprep.subr.mxu0 0.0
        %939 = vmatpush1.msra.mxu0 %v823
        %940 = vmatprep.subr.mxu0 0.0
        %941 = vmatpush1.msra.mxu0 %v822
        %942 = vmatprep.subr.mxu0 0.0
        %943 = vmatpush1.msra.mxu0 %v821
        %944 = vmatprep.subr.mxu0 0.0
        %945 = vmatpush1.msra.mxu0 %v820
        %946 = vmatprep.subr.mxu0 0.0
        %947 = vmatpush1.msra.mxu0 %v819
        %948 = vmatprep.subr.mxu0 0.0
        %949 = vmatpush1.msra.mxu0 %v818
        %950 = vmatprep.subr.mxu0 0.0
        %951 = vmatpush1.msra.mxu0 %v817
        %952 = vmatprep.subr.mxu0 0.0
        %953 = vmatpush1.msra.mxu0 %v816
        %954 = vmatprep.subr.mxu0 0.0
        %955 = vmatpush1.msra.mxu0 %v815
        %956 = vmatprep.subr.mxu0 0.0
        %957 = vmatpush1.msra.mxu0 %v814
        %958 = vmatprep.subr.mxu0 0.0
        %959 = vmatpush1.msra.mxu0 %v813
        %960 = vmatprep.subr.mxu0 0.0
        %961 = vmatpush1.msra.mxu0 %v812
        %962 = vmatprep.subr.mxu0 0.0
        %963 = vmatpush1.msra.mxu0 %v811
        %964 = vmatprep.subr.mxu0 0.0
        %965 = vmatpush1.msra.mxu0 %v810
        %966 = vmatprep.subr.mxu0 0.0
        %967 = vmatpush2.msra.mxu0 %v841
        %968 = vmatprep.subr.mxu0 0.0
        %969 = vmatpush2.msra.mxu0 %v840
        %970 = vmatprep.subr.mxu0 0.0
        %971 = vmatpush2.msra.mxu0 %v839
        %972 = vmatprep.subr.mxu0 0.0
        %973 = vmatpush2.msra.mxu0 %v838
        %974 = vmatprep.subr.mxu0 0.0
        %975 = vmatpush2.msra.mxu0 %v837
        %976 = vmatprep.subr.mxu0 0.0
        %977 = vmatpush2.msra.mxu0 %v836
        %978 = vmatprep.subr.mxu0 0.0
        %979 = vmatpush2.msra.mxu0 %v835
        %980 = vmatprep.subr.mxu0 0.0
        %981 = vmatpush2.msra.mxu0 %v834
        %982 = vmatprep.subr.mxu0 0.0
        %983 = vmatpush2.msra.mxu0 %v833
        %984 = vmatprep.subr.mxu0 0.0
        %985 = vmatpush2.msra.mxu0 %v832
        %986 = vmatprep.subr.mxu0 0.0
        %987 = vmatpush2.msra.mxu0 %v831
        %988 = vmatprep.subr.mxu0 0.0
        %989 = vmatpush2.msra.mxu0 %v830
        %990 = vmatprep.subr.mxu0 0.0
        %991 = vmatpush2.msra.mxu0 %v829
        %992 = vmatprep.subr.mxu0 0.0
        %993 = vmatpush2.msra.mxu0 %v828
        %994 = vmatprep.subr.mxu0 0.0
        %995 = vmatpush2.msra.mxu0 %v827
        %996 = vmatprep.subr.mxu0 0.0
        %997 = vmatpush2.msra.mxu0 %v826
        %998 = vmatprep.mubr.f32.mxu0 %v859
        %999 = vmatmul.mubr.f32.gmra.mxu0 %v855
        %v1000 = vpop.f32.mrf.mxu0
        %v1001 = vadd.f32 %v931, %v1000
        %v1002 = vpop.f32.mrf.mxu0
        %1003 = vdwg.mxu0
        %v1004 = vmax.f32 %v1001, 0.0
        %v1005 = vld [vmem:[%s5] sm:$0xff]
        %v1006 = vld [vmem:[%s5 + $0x8] sm:$0xff]
        %v1007 = vld [vmem:[%s5 + $0x10] sm:$0xff]
        %v1008 = vld [vmem:[%s5 + $0x18] sm:$0xff]
        %v1009 = vld [vmem:[%s6] sm:$0x1]
        %vm1010 = vcmask 261120
        %v1012 = vsel %vm1010, %v1004, 0
        %1014 = vmatprep.subr.mxu0 0.0
        %1015 = vmatpush1.msra.mxu0 0.0
        %1016 = vmatprep.subr.mxu0 0.0
        %1017 = vmatpush1.msra.mxu0 0.0
        %1018 = vmatprep.subr.mxu0 0.0
        %1019 = vmatpush1.msra.mxu0 0.0
        %1020 = vmatprep.subr.mxu0 0.0
        %1021 = vmatpush1.msra.mxu0 0.0
        %1022 = vmatprep.subr.mxu0 0.0
        %1023 = vmatpush1.msra.mxu0 0.0
        %1024 = vmatprep.subr.mxu0 0.0
        %1025 = vmatpush1.msra.mxu0 0.0
        %1026 = vmatprep.subr.mxu0 0.0
        %1027 = vmatpush1.msra.mxu0 0.0
        %1028 = vmatprep.subr.mxu0 0.0
        %1029 = vmatpush1.msra.mxu0 0.0
        %1030 = vmatprep.subr.mxu0 0.0
        %1031 = vmatpush1.msra.mxu0 0.0
        %1032 = vmatprep.subr.mxu0 0.0
        %1033 = vmatpush1.msra.mxu0 0.0
        %1034 = vmatprep.subr.mxu0 0.0
        %1035 = vmatpush1.msra.mxu0 0.0
        %1036 = vmatprep.subr.mxu0 0.0
        %1037 = vmatpush1.msra.mxu0 0.0
        %1038 = vmatprep.subr.mxu0 0.0
        %1039 = vmatpush1.msra.mxu0 %v1008
        %1040 = vmatprep.subr.mxu0 0.0
        %1041 = vmatpush1.msra.mxu0 %v1007
        %1042 = vmatprep.subr.mxu0 0.0
        %1043 = vmatpush1.msra.mxu0 %v1006
        %1044 = vmatprep.subr.mxu0 0.0
        %1045 = vmatpush1.msra.mxu0 %v1005
        %1046 = vmatprep.subr.mxu0 0.0
        %1047 = vmatpush2.msra.mxu0 0.0
        %1048 = vmatprep.subr.mxu0 0.0
        %1049 = vmatpush2.msra.mxu0 0.0
        %1050 = vmatprep.subr.mxu0 0.0
        %1051 = vmatpush2.msra.mxu0 0.0
        %1052 = vmatprep.subr.mxu0 0.0
        %1053 = vmatpush2.msra.mxu0 0.0
        %1054 = vmatprep.subr.mxu0 0.0
        %1055 = vmatpush2.msra.mxu0 0.0
        %1056 = vmatprep.subr.mxu0 0.0
        %1057 = vmatpush2.msra.mxu0 0.0
        %1058 = vmatprep.subr.mxu0 0.0
        %1059 = vmatpush2.msra.mxu0 0.0
        %1060 = vmatprep.subr.mxu0 0.0
        %1061 = vmatpush2.msra.mxu0 0.0
        %1062 = vmatprep.subr.mxu0 0.0
        %1063 = vmatpush2.msra.mxu0 0.0
        %1064 = vmatprep.subr.mxu0 0.0
        %1065 = vmatpush2.msra.mxu0 0.0
        %1066 = vmatprep.subr.mxu0 0.0
        %1067 = vmatpush2.msra.mxu0 0.0
        %1068 = vmatprep.subr.mxu0 0.0
        %1069 = vmatpush2.msra.mxu0 0.0
        %1070 = vmatprep.subr.mxu0 0.0
        %1071 = vmatpush2.msra.mxu0 0.0
        %1072 = vmatprep.subr.mxu0 0.0
        %1073 = vmatpush2.msra.mxu0 0.0
        %1074 = vmatprep.subr.mxu0 0.0
        %1075 = vmatpush2.msra.mxu0 0.0
        %1076 = vmatprep.subr.mxu0 0.0
        %1077 = vmatpush2.msra.mxu0 0.0
        %1078 = vmatprep.mubr.f32.mxu0 0.0
        %1079 = vmatmul.mubr.f32.gmra.mxu0 %v1012
        %v1080 = vpop.f32.mrf.mxu0
        %v1081 = vadd.f32 %v1009, %v1080
        %v1082 = vpop.f32.mrf.mxu0
        %1083 = vdwg.mxu0
        %1084 = vst [vmem:[%s435] sm:$0x1] %v1081
        %s1085 = sand.u32 %s181, 1
        %s1086 = scalar_lea.sflag [#allocation5], %s1085
        %s1087 = sand.u32 %s181, 1
        %s1088 = scalar_lea.vmem [#allocation4], %s1087
        // Predicated region
        $region87: #{classification_cnn_forward.1} parent=81 // pred_check
          %p1089 = pneg %p191
        $region88: #{classification_cnn_forward.1} parent=81 // pred_check_branch
          %1091 = sbr.rel (%p1089) target = $region90
        $region89: #{classification_cnn_forward.1} parent=81 // pred_region
          %s1093 = ssub.s32 16, 16
          %1094 = vsyncadd %s1086, %s1093
          %s1095 = smul.addr %s21, 16
          %s1096 = scalar_lea.hbm %s7, %s1095
          %s1098 = sshll.u32 %s1088, 4
          %s1099 = int_to_ptr.vmem [resolvable:$true] %s1098
          %1101 = dma.vmem_to_hbm [thread:$0]  %s1099, 16, %s1096, %s1086
        $region90: #{classification_cnn_forward.1} parent=81 // pred_fallthru
          _
      $region82: #{classification_cnn_forward.1} parent=5 // pred_fallthru
        _
      %p1102 = scmp.le.s32.totalorder 2, %s16
      // Predicated region
      $region91: #{classification_cnn_forward.1} parent=5 // pred_check
        %p1103 = pneg %p1102
      $region92: #{classification_cnn_forward.1} parent=5 // pred_check_branch
        %1105 = sbr.rel (%p1103) target = $region94
      $region93: #{classification_cnn_forward.1} parent=5 // pred_region
        %s1106 = ssub.s32 %s16, 2
        // Predicated region
        $region95: #{classification_cnn_forward.1} parent=93 // pred_check
          %p1107 = pneg %p197
        $region96: #{classification_cnn_forward.1} parent=93 // pred_check_branch
          %1109 = sbr.rel (%p1107) target = $region98
        $region97: #{classification_cnn_forward.1} parent=93 // pred_region
          %s1110 = sand.u32 %s182, 1
          %s1111 = scalar_lea.sflag [#allocation5], %s1110
          %s1112 = sand.u32 %s182, 1
          %s1113 = scalar_lea.vmem [#allocation4], %s1112
          %1114 = dma.done %s1111, 16
        $region98: #{classification_cnn_forward.1} parent=93 // pred_fallthru
          _
      $region94: #{classification_cnn_forward.1} parent=5 // pred_fallthru
        _
    $region6: #{classification_cnn_forward.1} parent=1 // loop_footer
      %s20 = sadd.s32 1, %s16
    $region7: #{classification_cnn_forward.1} parent=1 // loop_footer_branch
      %15 = sbr.rel target = $region3
    $region8: #{classification_cnn_forward.1} parent=1 // loop_exit
      _
    %1115 = vsyncpa [#allocation5], 1
    %s1116 = scalar_lea.sflag [#allocation5], 1
    %1117 = vsyncpa %s1116, 1

</llo_original>
